<compile_context>
chip_gen: v6e
topology: v6e:2x2x1
jax: 0.10.0
libtpu: 0.0.40
codegen_flags: <defaults>
</compile_context>

<pallas_src>
import functools

import jax
import jax.numpy as jnp
import numpy as np
from jax import lax
from jax.experimental import pallas as pl
from jax.experimental.pallas import tpu as pltpu

# ----------------------------- configuration --------------------------------
BATCH = 2
SEQ = 8
DIM = 32          # LayerNorm / model dim
HIDDEN_DIM = 64   # feed-forward hidden dim
LN_EPS = 1e-5     # torch nn.LayerNorm default eps
ROW_TILE = 256    # row-block size for the gridded (large-input / v7x dual-TC) path


# ------------------------------ in-kernel math -------------------------------
def _erf(z):
    # Abramowitz & Stegun 7.1.26 rational approximation (|err| <= 1.5e-7).
    a1, a2, a3, a4, a5 = 0.254829592, -0.284496736, 1.421413741, -1.453152027, 1.061405429
    p = 0.3275911
    s = jnp.where(z >= 0.0, 1.0, -1.0)
    az = jnp.abs(z)
    # EUP reciprocal co-issues with the VALU polynomial / MXU work (was a divide).
    t = pl.reciprocal(1.0 + p * az, approx=True)
    poly = ((((a5 * t + a4) * t + a3) * t + a2) * t + a1) * t
    return s * (1.0 - poly * jnp.exp(-az * az))


def _gelu_exact(x):
    # torch nn.GELU() default: 0.5 * x * (1 + erf(x / sqrt(2)))
    return 0.5 * x * (1.0 + _erf(x * 0.7071067811865475))


# --------------------------- fused forward kernel ----------------------------
def ffn_postnorm_kernel(x_ref, w1_ref, w2_ref, prm_ref, o_ref, *, dim, hidden):
    # x_ref: (R, D) f32   w1: (D, H) bf16   w2: (H, D) bf16
    # prm:  (4, max(D,H)) f32 slab -> rows: [b1 | b2 | gamma | beta]
    # o_ref: (R, D) f32
    x = x_ref[...]                                    # f32, kept for the residual
    b1 = prm_ref[0:1, :hidden]                        # (1, H)
    b2 = prm_ref[1:2, :dim]                           # (1, D)
    gamma = prm_ref[2:3, :dim]                        # (1, D)
    beta = prm_ref[3:4, :dim]                         # (1, D)

    # fc1 (bf16 operands, f32 MXU accumulation) + exact GELU (f32 elementwise)
    h = jnp.dot(x.astype(jnp.bfloat16), w1_ref[...],
                preferred_element_type=jnp.float32) + b1
    h = _gelu_exact(h)

    # fc2 + residual (residual add stays in f32)
    y = jnp.dot(h.astype(jnp.bfloat16), w2_ref[...],
                preferred_element_type=jnp.float32) + b2 + x

    # post-LayerNorm over the feature axis
    mu = jnp.mean(y, axis=-1, keepdims=True)
    var = jnp.mean((y - mu) ** 2, axis=-1, keepdims=True)
    o_ref[...] = (y - mu) * lax.rsqrt(var + LN_EPS) * gamma + beta


# --------------------------------- wrapper ------------------------------------
def feedforward_residual_postnorm(x, w1, b1, w2, b2, gamma, beta):
    """y = LayerNorm(Linear2(GELU(Linear1(x))) + x), x of shape (..., D)."""
    orig_shape = x.shape
    d = orig_shape[-1]
    h = w1.shape[-1]
    rows = int(np.prod(orig_shape[:-1]))
    x2 = x.reshape(rows, d).astype(jnp.float32)       # D stays on the lane axis

    # bf16 weights -> half the weight DMA bytes, single-pass bf16 MXU matmuls.
    w1b = w1.astype(jnp.bfloat16)
    w2b = w2.astype(jnp.bfloat16)

    # Pack the four small vectors into ONE f32 slab: one DMA, one padded (8,128) tile.
    width = max(d, h)

    def _pad_row(v):
        v = v.reshape(1, -1).astype(jnp.float32)
        return jnp.pad(v, ((0, 0), (0, width - v.shape[-1])))

    prm = jnp.concatenate([_pad_row(b1), _pad_row(b2), _pad_row(gamma), _pad_row(beta)],
                          axis=0)                     # (4, width)

    kernel = functools.partial(ffn_postnorm_kernel, dim=d, hidden=h)

    if rows >= 2 * ROW_TILE and rows % ROW_TILE == 0:
        # Large-input path: 1-D row grid. Weights / params use index_map -> (0,0) so they
        # stay VMEM-resident across grid steps; "parallel" lets v7x shard row blocks
        # across its two TensorCores.
        out = pl.pallas_call(
            kernel,
            out_shape=jax.ShapeDtypeStruct((rows, d), jnp.float32),
            grid_spec=pltpu.PrefetchScalarGridSpec(
                num_scalar_prefetch=0,
                grid=(rows // ROW_TILE,),
                in_specs=[
                    pl.BlockSpec((ROW_TILE, d), lambda i: (i, 0)),
                    pl.BlockSpec((d, h), lambda i: (0, 0)),
                    pl.BlockSpec((h, d), lambda i: (0, 0)),
                    pl.BlockSpec((4, width), lambda i: (0, 0)),
                ],
                out_specs=pl.BlockSpec((ROW_TILE, d), lambda i: (i, 0)),
            ),
            compiler_params=pltpu.CompilerParams(dimension_semantics=("parallel",)),
        )(x2, w1b, w2b, prm)
    else:
        # Tiny-input path: single grid point, everything VMEM-resident, single launch.
        vmem = pl.BlockSpec(memory_space=pltpu.MemorySpace.VMEM)
        out = pl.pallas_call(
            kernel,
            out_shape=jax.ShapeDtypeStruct((rows, d), jnp.float32),
            in_specs=[vmem] * 4,
            out_specs=vmem,
        )(x2, w1b, w2b, prm)

    return out.reshape(orig_shape)


# ------------------------------ pure-JAX reference ----------------------------
def _reference(x2, w1, b1, w2, b2, gamma, beta):
    hid = jax.nn.gelu(x2 @ w1 + b1, approximate=False)
    y = hid @ w2 + b2 + x2
    mu = y.mean(-1, keepdims=True)
    var = ((y - mu) ** 2).mean(-1, keepdims=True)
    return (y - mu) / jnp.sqrt(var + LN_EPS) * gamma + beta


# ----------------------------------- main -------------------------------------
if __name__ == "__main__":
    key = jax.random.PRNGKey(0)
    kx, k1, k2, k3, k4, k5, k6 = jax.random.split(key, 7)

    lim1 = 1.0 / float(np.sqrt(DIM))
    lim2 = 1.0 / float(np.sqrt(HIDDEN_DIM))
    w1 = jax.random.uniform(k1, (DIM, HIDDEN_DIM), jnp.float32, -lim1, lim1)
    b1 = jax.random.uniform(k2, (HIDDEN_DIM,), jnp.float32, -lim1, lim1)
    w2 = jax.random.uniform(k3, (HIDDEN_DIM, DIM), jnp.float32, -lim2, lim2)
    b2 = jax.random.uniform(k4, (DIM,), jnp.float32, -lim2, lim2)
    gamma = 1.0 + 0.1 * jax.random.normal(k5, (DIM,), jnp.float32)
    beta = 0.1 * jax.random.normal(k6, (DIM,), jnp.float32)

    fwd = jax.jit(feedforward_residual_postnorm)

    # --- module-sized input: (2, 8, 32) -> single-block path ---
    x = jax.random.normal(kx, (BATCH, SEQ, DIM), jnp.float32)
    out = jax.block_until_ready(fwd(x, w1, b1, w2, b2, gamma, beta))
    assert out.shape == (BATCH, SEQ, DIM), out.shape
    assert bool(jnp.all(jnp.isfinite(out)))
    ref = _reference(x.reshape(-1, DIM), w1, b1, w2, b2, gamma, beta).reshape(out.shape)
    np.testing.assert_allclose(np.asarray(out), np.asarray(ref), atol=2e-2, rtol=2e-2)

    # --- larger input exercises the 1-D row-grid (v7x dual-TC friendly) path ---
    big_batch = (2 * ROW_TILE) // SEQ
    xb = jax.random.normal(kx, (big_batch, SEQ, DIM), jnp.float32)
    outb = jax.block_until_ready(fwd(xb, w1, b1, w2, b2, gamma, beta))
    refb = _reference(xb.reshape(-1, DIM), w1, b1, w2, b2, gamma, beta).reshape(outb.shape)
    np.testing.assert_allclose(np.asarray(outb), np.asarray(refb), atol=2e-2, rtol=2e-2)

    print("KERNEL_OK")
</pallas_src>

<mosaic_0001>
module attributes {stable_mosaic.version = 11 : i64} {
  func.func @ffn_postnorm_kernel(%arg0: memref<16x32xf32, #tpu.memory_space<vmem>>, %arg1: memref<32x64xbf16, #tpu.memory_space<vmem>>, %arg2: memref<64x32xbf16, #tpu.memory_space<vmem>>, %arg3: memref<4x64xf32, #tpu.memory_space<vmem>>, %arg4: memref<16x32xf32, #tpu.memory_space<vmem>>) attributes {dimension_semantics = [], scalar_prefetch = 0 : i64, scratch_operands = 0 : i64, tpu.core_type = #tpu.core_type<tc>} {
    %c0 = arith.constant 0 : index
    %c0_0 = arith.constant 0 : index
    %0 = vector.load %arg0[%c0, %c0_0] : memref<16x32xf32, #tpu.memory_space<vmem>>, vector<16x32xf32>
    %c0_1 = arith.constant 0 : index
    %c0_2 = arith.constant 0 : index
    %1 = vector.load %arg3[%c0_1, %c0_2] : memref<4x64xf32, #tpu.memory_space<vmem>>, vector<1x64xf32>
    %c1 = arith.constant 1 : index
    %c0_3 = arith.constant 0 : index
    %2 = vector.load %arg3[%c1, %c0_3] : memref<4x64xf32, #tpu.memory_space<vmem>>, vector<1x32xf32>
    %c2 = arith.constant 2 : index
    %c0_4 = arith.constant 0 : index
    %3 = vector.load %arg3[%c2, %c0_4] : memref<4x64xf32, #tpu.memory_space<vmem>>, vector<1x32xf32>
    %c3 = arith.constant 3 : index
    %c0_5 = arith.constant 0 : index
    %4 = vector.load %arg3[%c3, %c0_5] : memref<4x64xf32, #tpu.memory_space<vmem>>, vector<1x32xf32>
    %5 = arith.truncf %0 : vector<16x32xf32> to vector<16x32xbf16>
    %c0_6 = arith.constant 0 : index
    %c0_7 = arith.constant 0 : index
    %6 = vector.load %arg1[%c0_6, %c0_7] : memref<32x64xbf16, #tpu.memory_space<vmem>>, vector<32x64xbf16>
    %cst = arith.constant dense<0.000000e+00> : vector<16x64xf32>
    %7 = tpu.matmul %5, %6, %cst {dimension_numbers = #tpu.dot_dimension_numbers<[1], [0], [0], [1], [0, 0, 1, 1], [], []>} : vector<16x32xbf16>, vector<32x64xbf16>, vector<16x64xf32> -> vector<16x64xf32>
    %8 = vector.broadcast %1 : vector<1x64xf32> to vector<16x64xf32>
    %9 = arith.addf %7, %8 : vector<16x64xf32>
    %cst_8 = arith.constant 5.000000e-01 : f32
    %10 = vector.broadcast %cst_8 : f32 to vector<16x64xf32>
    %11 = arith.mulf %10, %9 : vector<16x64xf32>
    %cst_9 = arith.constant 0.707106769 : f32
    %12 = vector.broadcast %cst_9 : f32 to vector<16x64xf32>
    %13 = arith.mulf %9, %12 : vector<16x64xf32>
    %cst_10 = arith.constant 0.000000e+00 : f32
    %14 = vector.broadcast %cst_10 : f32 to vector<16x64xf32>
    %15 = arith.cmpf oge, %13, %14 : vector<16x64xf32>
    %cst_11 = arith.constant 1.000000e+00 : f32
    %cst_12 = arith.constant -1.000000e+00 : f32
    %16 = vector.broadcast %cst_11 : f32 to vector<16x64xf32>
    %17 = vector.broadcast %cst_12 : f32 to vector<16x64xf32>
    %18 = arith.select %15, %16, %17 : vector<16x64xi1>, vector<16x64xf32>
    %19 = math.absf %13 : vector<16x64xf32>
    %cst_13 = arith.constant 0.327591091 : f32
    %20 = vector.broadcast %cst_13 : f32 to vector<16x64xf32>
    %21 = arith.mulf %20, %19 : vector<16x64xf32>
    %cst_14 = arith.constant 1.000000e+00 : f32
    %22 = vector.broadcast %cst_14 : f32 to vector<16x64xf32>
    %23 = arith.addf %22, %21 : vector<16x64xf32>
    %24 = tpu.reciprocal %23 {approx = true} : vector<16x64xf32> -> vector<16x64xf32>
    %cst_15 = arith.constant 1.06140542 : f32
    %25 = vector.broadcast %cst_15 : f32 to vector<16x64xf32>
    %26 = arith.mulf %25, %24 : vector<16x64xf32>
    %cst_16 = arith.constant -1.45315206 : f32
    %27 = vector.broadcast %cst_16 : f32 to vector<16x64xf32>
    %28 = arith.addf %26, %27 : vector<16x64xf32>
    %29 = arith.mulf %28, %24 : vector<16x64xf32>
    %cst_17 = arith.constant 1.42141378 : f32
    %30 = vector.broadcast %cst_17 : f32 to vector<16x64xf32>
    %31 = arith.addf %29, %30 : vector<16x64xf32>
    %32 = arith.mulf %31, %24 : vector<16x64xf32>
    %cst_18 = arith.constant -0.284496725 : f32
    %33 = vector.broadcast %cst_18 : f32 to vector<16x64xf32>
    %34 = arith.addf %32, %33 : vector<16x64xf32>
    %35 = arith.mulf %34, %24 : vector<16x64xf32>
    %cst_19 = arith.constant 0.254829586 : f32
    %36 = vector.broadcast %cst_19 : f32 to vector<16x64xf32>
    %37 = arith.addf %35, %36 : vector<16x64xf32>
    %38 = arith.mulf %37, %24 : vector<16x64xf32>
    %cst_20 = arith.constant 0.000000e+00 : f32
    %39 = vector.broadcast %cst_20 : f32 to vector<16x64xf32>
    %40 = arith.subf %39, %19 : vector<16x64xf32>
    %41 = arith.mulf %40, %19 : vector<16x64xf32>
    %42 = math.exp %41 : vector<16x64xf32>
    %43 = arith.mulf %38, %42 : vector<16x64xf32>
    %cst_21 = arith.constant 1.000000e+00 : f32
    %44 = vector.broadcast %cst_21 : f32 to vector<16x64xf32>
    %45 = arith.subf %44, %43 : vector<16x64xf32>
    %46 = arith.mulf %18, %45 : vector<16x64xf32>
    %cst_22 = arith.constant 1.000000e+00 : f32
    %47 = vector.broadcast %cst_22 : f32 to vector<16x64xf32>
    %48 = arith.addf %47, %46 : vector<16x64xf32>
    %49 = arith.mulf %11, %48 : vector<16x64xf32>
    %50 = arith.truncf %49 : vector<16x64xf32> to vector<16x64xbf16>
    %c0_23 = arith.constant 0 : index
    %c0_24 = arith.constant 0 : index
    %51 = vector.load %arg2[%c0_23, %c0_24] : memref<64x32xbf16, #tpu.memory_space<vmem>>, vector<64x32xbf16>
    %cst_25 = arith.constant dense<0.000000e+00> : vector<16x32xf32>
    %52 = tpu.matmul %50, %51, %cst_25 {dimension_numbers = #tpu.dot_dimension_numbers<[1], [0], [0], [1], [0, 0, 1, 1], [], []>} : vector<16x64xbf16>, vector<64x32xbf16>, vector<16x32xf32> -> vector<16x32xf32>
    %53 = vector.broadcast %2 : vector<1x32xf32> to vector<16x32xf32>
    %54 = arith.addf %52, %53 : vector<16x32xf32>
    %55 = arith.addf %54, %0 : vector<16x32xf32>
    %cst_26 = arith.constant dense<0.000000e+00> : vector<16xf32>
    %56 = vector.multi_reduction <add>, %55, %cst_26 [1] : vector<16x32xf32> to vector<16xf32>
    %57 = vector.shape_cast %56 : vector<16xf32> to vector<16x1xf32>
    %cst_27 = arith.constant 3.200000e+01 : f32
    %58 = vector.broadcast %cst_27 : f32 to vector<16x1xf32>
    %59 = arith.divf %57, %58 : vector<16x1xf32>
    %60 = vector.broadcast %59 : vector<16x1xf32> to vector<16x32xf32>
    %61 = arith.subf %55, %60 : vector<16x32xf32>
    %62 = arith.mulf %61, %61 : vector<16x32xf32>
    %cst_28 = arith.constant dense<0.000000e+00> : vector<16xf32>
    %63 = vector.multi_reduction <add>, %62, %cst_28 [1] : vector<16x32xf32> to vector<16xf32>
    %64 = vector.shape_cast %63 : vector<16xf32> to vector<16x1xf32>
    %cst_29 = arith.constant 3.200000e+01 : f32
    %65 = vector.broadcast %cst_29 : f32 to vector<16x1xf32>
    %66 = arith.divf %64, %65 : vector<16x1xf32>
    %67 = vector.broadcast %59 : vector<16x1xf32> to vector<16x32xf32>
    %68 = arith.subf %55, %67 : vector<16x32xf32>
    %cst_30 = arith.constant 9.99999974E-6 : f32
    %69 = vector.broadcast %cst_30 : f32 to vector<16x1xf32>
    %70 = arith.addf %66, %69 : vector<16x1xf32>
    %71 = math.rsqrt %70 : vector<16x1xf32>
    %72 = vector.broadcast %71 : vector<16x1xf32> to vector<16x32xf32>
    %73 = arith.mulf %68, %72 : vector<16x32xf32>
    %74 = vector.broadcast %3 : vector<1x32xf32> to vector<16x32xf32>
    %75 = arith.mulf %73, %74 : vector<16x32xf32>
    %76 = vector.broadcast %4 : vector<1x32xf32> to vector<16x32xf32>
    %77 = arith.addf %75, %76 : vector<16x32xf32>
    %c0_31 = arith.constant 0 : index
    %c0_32 = arith.constant 0 : index
    %78 = vector.load %arg4[%c0_31, %c0_32] : memref<16x32xf32, #tpu.memory_space<vmem>>, vector<16x32xf32>
    tpu.vector_store %arg4[%c0_31, %c0_32], %77 {strides = array<i32>} : memref<16x32xf32, #tpu.memory_space<vmem>>, vector<16x32xf32>,
    return
  }
}

</mosaic_0001>

<llo_original>
// kernel: feedforward_residual_postnorm.1
$region0: #{feedforward_residual_postnorm.1}
  #allocation0 [shape = 'u32[]', space=smem, size = 0x4, offset = 0x4, fixed_abs, tag = 'smem constant byte address 0x4 - core index']
  #allocation1 [shape = 'u32[144,128]{1,0:T(1,128)}', space=vmem, size = 0x12000, scoped, tag = 'internal scratch']
  %s0 = inlined_call_operand.vmem [shape: f32[16,32], index: 0, kind: input, shape index: {}]
  %s1 = inlined_call_operand.vmem [shape: bf16[32,64], index: 1, kind: input, shape index: {}]
  %s2 = inlined_call_operand.vmem [shape: bf16[64,32], index: 2, kind: input, shape index: {}]
  %s3 = inlined_call_operand.vmem [shape: f32[4,64], index: 3, kind: input, shape index: {}]
  %s4 = inlined_call_operand.hbm [shape: f32[16,32], index: 4, kind: output, shape index: {}]
  %s5 = sld [smem:[#allocation0]]
  $region26: #{feedforward_residual_postnorm.1} parent=0
    _
  %s7 = ssub.s32 1, %s5
  %s8 = scalar_select 0, %s7, %s5
  $region1: #{feedforward_residual_postnorm.1} parent=0
    #allocation2 [shape = 'u8[8192]{0}', space=vmem, size = 0x2000, scoped, tag = 'output window, operand 0, single buffered']
    #allocation3 [shape = 's32[1]{0}', space=sflag, size = 0x4, scoped, tag = 'scoped memory for feedforward_residual_postnorm.1']
    %9 = vsyncpa [#allocation3], 0
    // Predicated region
    $region2: #{feedforward_residual_postnorm.1} parent=1 // pred_check
      _
    $region3: #{feedforward_residual_postnorm.1} parent=1 // pred_check_branch
      %11 = sbr.rel (0) target = $region5
    $region4: #{feedforward_residual_postnorm.1} parent=1 // pred_region
      _
    $region5: #{feedforward_residual_postnorm.1} parent=1 // pred_fallthru
      _
    // Predicated region
    $region6: #{feedforward_residual_postnorm.1} parent=1 // pred_check
      _
    $region7: #{feedforward_residual_postnorm.1} parent=1 // pred_check_branch
      %13 = sbr.rel (0) target = $region9
    $region8: #{feedforward_residual_postnorm.1} parent=1 // pred_region
      _
    $region9: #{feedforward_residual_postnorm.1} parent=1 // pred_fallthru
      _
    // Predicated region
    $region10: #{feedforward_residual_postnorm.1} parent=1 // pred_check
      _
    $region11: #{feedforward_residual_postnorm.1} parent=1 // pred_check_branch
      %15 = sbr.rel (0) target = $region13
    $region12: #{feedforward_residual_postnorm.1} parent=1 // pred_region
      _
    $region13: #{feedforward_residual_postnorm.1} parent=1 // pred_fallthru
      _
    // Predicated region
    $region14: #{feedforward_residual_postnorm.1} parent=1 // pred_check
      _
    $region15: #{feedforward_residual_postnorm.1} parent=1 // pred_check_branch
      %17 = sbr.rel (0) target = $region17
    $region16: #{feedforward_residual_postnorm.1} parent=1 // pred_region
      _
    $region17: #{feedforward_residual_postnorm.1} parent=1 // pred_fallthru
      _
    %v19 = vld [vmem:[%s0] sm:$0xff]
    %v20 = vld [vmem:[%s0 + $0x8] sm:$0xff]
    %v21 = vld [vmem:[%s3] sm:$0x1]
    %v22 = vld [vmem:[%s3 + $0x1] sm:$0x1]
    %v23 = vld [vmem:[%s3 + $0x2] sm:$0x1]
    %v24 = vld [vmem:[%s3 + $0x3] sm:$0x1]
    %v25 = vpack.c.bf16 %v20, %v19
    %v26 = vld [vmem:[%s1] sm:$0xf]
    %v27 = vld [vmem:[%s1 + $0x4] sm:$0xf]
    %v28 = vld [vmem:[%s1 + $0x8] sm:$0xf]
    %v29 = vld [vmem:[%s1 + $0xc] sm:$0xf]
    %v30 = vlaneseq
    %v31 = vshrl.u32 %v30, 7
    %v32 = vsub.s32 0, %v31
    %v33 = vrot.slane %v21, %v32
    %v38 = vunpack.c.l.b16 %v26
    %v39 = vunpack.c.l.b16 %v27
    %v40 = vunpack.c.l.b16 %v28
    %v41 = vunpack.c.l.b16 %v29
    %v42 = vpack.c.b16 %v39, %v38
    %v43 = vpack.c.b16 %v41, %v40
    %vm46 = vcmask 261120
    %v48 = vsel %vm46, %v25, 0
    %50 = vmatprep.subr.bf16.mxu0 0
    %51 = vmatpush1.bf16.msra.mxu0 0
    %52 = vmatprep.subr.bf16.mxu0 0
    %53 = vmatpush1.bf16.msra.mxu0 0
    %54 = vmatprep.subr.bf16.mxu0 0
    %55 = vmatpush1.bf16.msra.mxu0 0
    %56 = vmatprep.subr.bf16.mxu0 0
    %57 = vmatpush1.bf16.msra.mxu0 0
    %58 = vmatprep.subr.bf16.mxu0 0
    %59 = vmatpush1.bf16.msra.mxu0 0
    %60 = vmatprep.subr.bf16.mxu0 0
    %61 = vmatpush1.bf16.msra.mxu0 0
    %62 = vmatprep.subr.bf16.mxu0 0
    %63 = vmatpush1.bf16.msra.mxu0 %v43
    %64 = vmatprep.subr.bf16.mxu0 0
    %65 = vmatpush1.bf16.msra.mxu0 %v42
    %66 = vmatprep.subr.bf16.mxu0 0
    %67 = vmatpush2.bf16.msra.mxu0 0
    %68 = vmatprep.subr.bf16.mxu0 0
    %69 = vmatpush2.bf16.msra.mxu0 0
    %70 = vmatprep.subr.bf16.mxu0 0
    %71 = vmatpush2.bf16.msra.mxu0 0
    %72 = vmatprep.subr.bf16.mxu0 0
    %73 = vmatpush2.bf16.msra.mxu0 0
    %74 = vmatprep.subr.bf16.mxu0 0
    %75 = vmatpush2.bf16.msra.mxu0 0
    %76 = vmatprep.subr.bf16.mxu0 0
    %77 = vmatpush2.bf16.msra.mxu0 0
    %78 = vmatprep.subr.bf16.mxu0 0
    %79 = vmatpush2.bf16.msra.mxu0 0
    %80 = vmatprep.subr.bf16.mxu0 0
    %81 = vmatpush2.bf16.msra.mxu0 0
    %82 = vmatprep.mubr.bf16.mxu0 0
    %83 = vmatmul.mubr.bf16.gmra.mxu0 %v48
    %v84 = vpop.f32.mrf.mxu0
    %v85 = vadd.f32 %v33, %v84
    %v86 = vpop.f32.mrf.mxu0
    %v87 = vpop.f32.mrf.mxu0
    %v88 = vadd.f32 %v33, %v87
    %v89 = vpop.f32.mrf.mxu0
    %90 = vdwg.mxu0
    %v91 = vmul.f32 %v85, 0.5
    %v92 = vmul.f32 %v88, 0.5
    %v93 = vmul.f32 %v85, 0.70710677
    %v94 = vmul.f32 %v88, 0.70710677
    %vm95 = vcmp.ge.f32.partialorder %v93, 0.0
    %vm96 = vcmp.ge.f32.partialorder %v94, 0.0
    %v97 = vsel %vm95, 1.0, -1.0
    %v98 = vsel %vm96, 1.0, -1.0
    %v99 = vand.u32 2147483647, %v93
    %v100 = vand.u32 2147483647, %v94
    %v101 = vmul.f32 %v99, 0.3275911
    %v102 = vmul.f32 %v100, 0.3275911
    %v103 = vadd.f32 %v101, 1.0
    %v104 = vadd.f32 %v102, 1.0
    %v105 = vrcp.pop %v103
    %v106 = vrcp.pop %v104
    %v107 = vmul.f32 %v105, 1.0614054
    %v108 = vmul.f32 %v106, 1.0614054
    %v109 = vadd.f32 %v107, -1.4531521
    %v110 = vadd.f32 %v108, -1.4531521
    %v111 = vmul.f32 %v109, %v105
    %v112 = vmul.f32 %v110, %v106
    %v113 = vadd.f32 %v111, 1.4214138
    %v114 = vadd.f32 %v112, 1.4214138
    %v115 = vmul.f32 %v113, %v105
    %v116 = vmul.f32 %v114, %v106
    %v117 = vadd.f32 %v115, -0.28449672
    %v118 = vadd.f32 %v116, -0.28449672
    %v119 = vmul.f32 %v117, %v105
    %v120 = vmul.f32 %v118, %v106
    %v121 = vadd.f32 %v119, 0.2548296
    %v122 = vadd.f32 %v120, 0.2548296
    %v123 = vmul.f32 %v121, %v105
    %v124 = vmul.f32 %v122, %v106
    %v125 = vsub.f32 0.0, %v99
    %v126 = vsub.f32 0.0, %v100
    %v127 = vmul.f32 %v125, %v99
    %v128 = vmul.f32 %v126, %v100
    %v129 = vmul.f32 %v127, 1.442695
    %v130 = vpow.pop %v129
    %v131 = vmul.f32 %v128, 1.442695
    %v132 = vpow.pop %v131
    %v133 = vmul.f32 %v123, %v130
    %v134 = vmul.f32 %v124, %v132
    %v135 = vsub.f32 1.0, %v133
    %v136 = vsub.f32 1.0, %v134
    %v137 = vmul.f32 %v97, %v135
    %v138 = vmul.f32 %v98, %v136
    %v139 = vadd.f32 %v137, 1.0
    %v140 = vadd.f32 %v138, 1.0
    %v141 = vmul.f32 %v91, %v139
    %v142 = vmul.f32 %v92, %v140
    %v143 = vpack.c.bf16 %v142, %v141
    %v144 = vld [vmem:[%s2] sm:$0xf]
    %v145 = vld [vmem:[%s2 + $0x4] sm:$0xf]
    %v146 = vld [vmem:[%s2 + $0x8] sm:$0xf]
    %v147 = vld [vmem:[%s2 + $0xc] sm:$0xf]
    %v148 = vld [vmem:[%s2 + $0x10] sm:$0xf]
    %v149 = vld [vmem:[%s2 + $0x14] sm:$0xf]
    %v150 = vld [vmem:[%s2 + $0x18] sm:$0xf]
    %v151 = vld [vmem:[%s2 + $0x1c] sm:$0xf]
    %v152 = vlaneseq
    %v153 = vshrl.u32 %v152, 7
    %v154 = vsub.s32 0, %v153
    %v155 = vrot.slane %v22, %v154
    %v164 = vunpack.c.l.b16 %v144
    %v165 = vunpack.c.l.b16 %v145
    %v166 = vunpack.c.l.b16 %v146
    %v167 = vunpack.c.l.b16 %v147
    %v168 = vunpack.c.l.b16 %v148
    %v169 = vunpack.c.l.b16 %v149
    %v170 = vunpack.c.l.b16 %v150
    %v171 = vunpack.c.l.b16 %v151
    %v172 = vpack.c.b16 %v165, %v164
    %v173 = vpack.c.b16 %v167, %v166
    %v174 = vpack.c.b16 %v169, %v168
    %v175 = vpack.c.b16 %v171, %v170
    %vm180 = vcmask 523264
    %v182 = vsel %vm180, %v143, 0
    %184 = vmatprep.subr.bf16.mxu0 0
    %185 = vmatpush1.bf16.msra.mxu0 0
    %186 = vmatprep.subr.bf16.mxu0 0
    %187 = vmatpush1.bf16.msra.mxu0 0
    %188 = vmatprep.subr.bf16.mxu0 0
    %189 = vmatpush1.bf16.msra.mxu0 0
    %190 = vmatprep.subr.bf16.mxu0 0
    %191 = vmatpush1.bf16.msra.mxu0 0
    %192 = vmatprep.subr.bf16.mxu0 0
    %193 = vmatpush1.bf16.msra.mxu0 %v175
    %194 = vmatprep.subr.bf16.mxu0 0
    %195 = vmatpush1.bf16.msra.mxu0 %v174
    %196 = vmatprep.subr.bf16.mxu0 0
    %197 = vmatpush1.bf16.msra.mxu0 %v173
    %198 = vmatprep.subr.bf16.mxu0 0
    %199 = vmatpush1.bf16.msra.mxu0 %v172
    %200 = vmatprep.subr.bf16.mxu0 0
    %201 = vmatpush2.bf16.msra.mxu0 0
    %202 = vmatprep.subr.bf16.mxu0 0
    %203 = vmatpush2.bf16.msra.mxu0 0
    %204 = vmatprep.subr.bf16.mxu0 0
    %205 = vmatpush2.bf16.msra.mxu0 0
    %206 = vmatprep.subr.bf16.mxu0 0
    %207 = vmatpush2.bf16.msra.mxu0 0
    %208 = vmatprep.subr.bf16.mxu0 0
    %209 = vmatpush2.bf16.msra.mxu0 0
    %210 = vmatprep.subr.bf16.mxu0 0
    %211 = vmatpush2.bf16.msra.mxu0 0
    %212 = vmatprep.subr.bf16.mxu0 0
    %213 = vmatpush2.bf16.msra.mxu0 0
    %214 = vmatprep.subr.bf16.mxu0 0
    %215 = vmatpush2.bf16.msra.mxu0 0
    %216 = vmatprep.mubr.bf16.mxu0 0
    %217 = vmatmul.mubr.bf16.gmra.mxu0 %v182
    %v218 = vpop.f32.mrf.mxu0
    %v219 = vadd.f32 %v155, %v218
    %v220 = vpop.f32.mrf.mxu0
    %v221 = vpop.f32.mrf.mxu0
    %v222 = vadd.f32 %v155, %v221
    %v223 = vpop.f32.mrf.mxu0
    %224 = vdwg.mxu0
    %v225 = vadd.f32 %v219, %v19
    %v226 = vadd.f32 %v222, %v20
    %v227 = vsel %vm46, %v225, 0.0
    %228 = vadd.xlane.f32.xlu0 %v227
    %v229 = vpop.xlane.xlu0 %228
    %v230 = vsel %vm46, %v226, 0.0
    %231 = vadd.xlane.f32.xlu0 %v230
    %v232 = vpop.xlane.xlu0 %231
    %v233 = vrcp.pop 32.0
    %v234 = vmul.f32 %v229, %v233
    %v235 = vmul.f32 %v232, %v233
    %v236 = vsub.f32 %v225, %v234
    %v237 = vsub.f32 %v226, %v235
    %v238 = vmul.f32 %v236, %v236
    %v239 = vmul.f32 %v237, %v237
    %v240 = vsel %vm46, %v238, 0.0
    %241 = vadd.xlane.f32.xlu0 %v240
    %v242 = vpop.xlane.xlu0 %241
    %v243 = vsel %vm46, %v239, 0.0
    %244 = vadd.xlane.f32.xlu0 %v243
    %v245 = vpop.xlane.xlu0 %244
    %v246 = vmul.f32 %v242, %v233
    %v247 = vmul.f32 %v245, %v233
    %v248 = vadd.f32 %v246, 1e-05
    %v249 = vadd.f32 %v247, 1e-05
    %v250 = vrsqrt.pop %v248
    %v251 = vrsqrt.pop %v249
    %v252 = vmul.f32 %v236, %v250
    %v253 = vmul.f32 %v237, %v251
    %v254 = vlaneseq
    %v255 = vshrl.u32 %v254, 7
    %v256 = vsub.s32 0, %v255
    %v257 = vrot.slane %v23, %v256
    %v258 = vmul.f32 %v252, %v257
    %v259 = vmul.f32 %v253, %v257
    %v260 = vlaneseq
    %v261 = vshrl.u32 %v260, 7
    %v262 = vsub.s32 0, %v261
    %v263 = vrot.slane %v24, %v262
    %v264 = vadd.f32 %v258, %v263
    %v265 = vadd.f32 %v259, %v263
    %266 = vst.msk [vmem:[#allocation2] sm:$0xff] %vm46, %v264
    %267 = vst.msk [vmem:[#allocation2 + $0x8] sm:$0xff] %vm46, %v265
    // Predicated region
    $region18: #{feedforward_residual_postnorm.1} parent=1 // pred_check
      _
    $region19: #{feedforward_residual_postnorm.1} parent=1 // pred_check_branch
      %269 = sbr.rel (0) target = $region21
    $region20: #{feedforward_residual_postnorm.1} parent=1 // pred_region
      %s271 = ssub.s32 256, 256
      %272 = vsyncadd [#allocation3], %s271
      %s273 = sshll.u32 [#allocation2], 4
      %s274 = int_to_ptr.vmem [resolvable:$true] %s273
      %279 = dma.vmem_to_hbm [thread:$0]  %s274, 256, %s4, [#allocation3], 128, 128, 8
    $region21: #{feedforward_residual_postnorm.1} parent=1 // pred_fallthru
      _
    // Predicated region
    $region22: #{feedforward_residual_postnorm.1} parent=1 // pred_check
      _
    $region23: #{feedforward_residual_postnorm.1} parent=1 // pred_check_branch
      %281 = sbr.rel (0) target = $region25
    $region24: #{feedforward_residual_postnorm.1} parent=1 // pred_region
      %282 = dma.done [#allocation3], 256
    $region25: #{feedforward_residual_postnorm.1} parent=1 // pred_fallthru
      _
    %283 = vsyncpa [#allocation3], 1

</llo_original>
